<compile_context>
chip_gen: v5e
topology: v5e:2x2
jax: 0.10.0
libtpu: 0.0.40
codegen_flags: <defaults>
</compile_context>

<pallas_src>
import functools

import jax
import jax.numpy as jnp
from jax.experimental import pallas as pl
from jax.experimental.pallas import tpu as pltpu


def _plan_row_chunks(num_rows, row_bytes, *, target_chunk_bytes,
                     single_dma_bytes, max_chunks):
    """Static (row_start, row_count) chunk plan for a [num_rows, F] slab.

    Byte-based: tiny slabs -> one whole-slab DMA; large slabs -> a few
    ~target_chunk_bytes chunks (last chunk explicitly size-clamped so no DMA
    is ever out of bounds and every output row is written).
    """
    total_bytes = num_rows * row_bytes
    if num_rows <= 1 or total_bytes <= single_dma_bytes:
        return [(0, num_rows)]
    num_chunks = int(min(max_chunks,
                         max(1, total_bytes // target_chunk_bytes),
                         num_rows))
    if num_chunks <= 1:
        return [(0, num_rows)]
    rows_per_chunk = -(-num_rows // num_chunks)  # ceil div
    chunks = []
    r = 0
    while r < num_rows:
        rc = min(rows_per_chunk, num_rows - r)   # clamp the tail chunk
        chunks.append((r, rc))
        r += rc
    return chunks


def _idx_dma_kernel(x_hbm, o_hbm, sems, *, index, chunks, rows_per_outer,
                    num_outer):
    """Start ALL row-chunk DMAs of bundle entry `index` back-to-back
    (HBM -> HBM, one semaphore per chunk), then wait them all."""
    if num_outer == 1:
        base = 0
    else:
        base = pl.multiple_of(pl.program_id(0) * rows_per_outer,
                              rows_per_outer)

    descs = []
    for i, (r0, rc) in enumerate(chunks):
        cp = pltpu.make_async_copy(
            x_hbm.at[index, pl.ds(base + r0, rc), :],
            o_hbm.at[pl.ds(base + r0, rc), :],
            sems.at[i],
        )
        cp.start()
        descs.append(cp)
    for cp in descs:
        cp.wait()


def idx_select(bundled_inputs: jax.Array, index: int, *,
               target_chunk_bytes: int = 4 << 20,
               single_dma_bytes: int = 2 << 20,
               outer_split_bytes: int = 8 << 20,
               max_chunks: int = 8) -> jax.Array:
    """Pallas equivalent of Idx(index)(bundled_inputs) for a stacked bundle.

    bundled_inputs: [N, B, F]; returns bundled_inputs[index] with shape [B, F].
    `index` is a Python int (constructor constant in the PyTorch module), so
    it is baked into the DMA source address statically.
    """
    n, b, f = bundled_inputs.shape
    index = int(index)
    if not 0 <= index < n:
        raise ValueError(f"index {index} out of range for bundle of size {n}")

    itemsize = jnp.dtype(bundled_inputs.dtype).itemsize
    row_bytes = f * itemsize
    total_bytes = b * row_bytes

    # 2-way outer split (one chunk set per TensorCore on v7x) only for big
    # slabs with evenly splittable rows; otherwise a single grid step.
    num_outer = 2 if (total_bytes >= outer_split_bytes and b % 2 == 0) else 1
    rows_per_outer = b // num_outer

    chunks = _plan_row_chunks(
        rows_per_outer, row_bytes,
        target_chunk_bytes=target_chunk_bytes,
        single_dma_bytes=single_dma_bytes,
        max_chunks=max_chunks,
    )

    kernel = functools.partial(
        _idx_dma_kernel,
        index=index,
        chunks=tuple(chunks),
        rows_per_outer=rows_per_outer,
        num_outer=num_outer,
    )

    return pl.pallas_call(
        kernel,
        out_shape=jax.ShapeDtypeStruct((b, f), bundled_inputs.dtype),
        grid=(num_outer,),
        # Raw HBM refs on both sides: no auto-DMA, no VMEM footprint at all.
        in_specs=[pl.BlockSpec(memory_space=pl.ANY)],
        out_specs=pl.BlockSpec(memory_space=pl.ANY),
        scratch_shapes=[pltpu.SemaphoreType.DMA((len(chunks),))],
        compiler_params=pltpu.CompilerParams(
            dimension_semantics=("parallel",),
            has_side_effects=True,
        ),
    )(bundled_inputs)

# TODO(synk): heterogeneous Python-tuple bundles (unequal shapes) are plain
# host-side indexing and need no kernel; only the stacked-array case is here.


if __name__ == "__main__":
    key = jax.random.PRNGKey(0)

    # Case 1: small f32 bundle (8 KiB slab) -> single whole-slab DMA path.
    N, B, F = 3, 16, 128
    INDEX = 1
    bundle = jax.random.normal(key, (N, B, F), dtype=jnp.float32)
    out = jax.block_until_ready(idx_select(bundle, INDEX))
    ref = bundle[INDEX]
    assert out.shape == ref.shape and out.dtype == ref.dtype
    assert jnp.array_equal(out, ref)

    # Case 2: bf16 bundle, different shape/index -> single whole-slab DMA.
    N2, B2, F2 = 4, 24, 256
    INDEX2 = 2
    bundle2 = jax.random.normal(jax.random.PRNGKey(0), (N2, B2, F2),
                                dtype=jnp.bfloat16)
    out2 = jax.block_until_ready(idx_select(bundle2, INDEX2))
    ref2 = bundle2[INDEX2]
    assert out2.shape == ref2.shape and out2.dtype == ref2.dtype
    assert jnp.array_equal(out2, ref2)

    # Case 3: force the overlapped multi-chunk path (start-all / wait-all)
    # with an uneven tail chunk (B=200 -> chunks of 67/67/66 rows).
    N3, B3, F3 = 2, 200, 256
    bundle3 = jax.random.normal(jax.random.PRNGKey(0), (N3, B3, F3),
                                dtype=jnp.float32)
    out3 = jax.block_until_ready(
        idx_select(bundle3, 0,
                   target_chunk_bytes=64 * 1024,
                   single_dma_bytes=32 * 1024))
    assert jnp.array_equal(out3, bundle3[0])

    # Case 4: force the 2-way outer split (per-TensorCore halves on v7x)
    # plus inner overlapped chunks; sequential-but-correct on v5e/v6e.
    N4, B4, F4 = 2, 64, 256
    bundle4 = jax.random.normal(jax.random.PRNGKey(0), (N4, B4, F4),
                                dtype=jnp.float32)
    out4 = jax.block_until_ready(
        idx_select(bundle4, 1,
                   outer_split_bytes=1,
                   target_chunk_bytes=8 * 1024,
                   single_dma_bytes=4 * 1024))
    assert jnp.array_equal(out4, bundle4[1])

    print("KERNEL_OK")
</pallas_src>

<mosaic_0001>
module attributes {stable_mosaic.version = 11 : i64} {
  func.func @_idx_dma_kernel(%arg0: i32, %arg1: memref<3x16x128xf32, #tpu.memory_space<any>>, %arg2: memref<16x128xf32, #tpu.memory_space<any>>, %arg3: memref<1x!tpu.dma_semaphore, #tpu.memory_space<semaphore_mem>>) attributes {dimension_semantics = [#tpu.dimension_semantics<parallel>], iteration_bounds = array<i64: 1>, scalar_prefetch = 0 : i64, scratch_operands = 1 : i64, tpu.core_type = #tpu.core_type<tc>, window_params = [{}, {}]} {
    %c1_i32 = arith.constant 1 : i32
    %c0_i32 = arith.constant 0 : i32
    %c0_i32_0 = arith.constant 0 : i32
    %c0_i32_1 = arith.constant 0 : i32
    %0 = tpu.memref_slice %arg1[%c1_i32, %c0_i32_0, %c0_i32_1] : memref<3x16x128xf32, #tpu.memory_space<any>> -> memref<1x16x128xf32, #tpu.memory_space<any>>
    %1 = tpu.memref_squeeze %0 : memref<1x16x128xf32, #tpu.memory_space<any>> -> memref<16x128xf32, #tpu.memory_space<any>>
    %c0_i32_2 = arith.constant 0 : i32
    %c0_i32_3 = arith.constant 0 : i32
    %2 = tpu.memref_slice %arg2[%c0_i32_2, %c0_i32_3] : memref<16x128xf32, #tpu.memory_space<any>> -> memref<16x128xf32, #tpu.memory_space<any>>
    %3 = tpu.memref_slice %arg3[%c0_i32] : memref<1x!tpu.dma_semaphore, #tpu.memory_space<semaphore_mem>> -> memref<1x!tpu.dma_semaphore, #tpu.memory_space<semaphore_mem>>
    %4 = tpu.memref_squeeze %3 : memref<1x!tpu.dma_semaphore, #tpu.memory_space<semaphore_mem>> -> memref<!tpu.dma_semaphore, #tpu.memory_space<semaphore_mem>>
    tpu.enqueue_dma source(%1 : memref<16x128xf32, #tpu.memory_space<any>>) target(%2 : memref<16x128xf32, #tpu.memory_space<any>>) target_semaphore(%4 : memref<!tpu.dma_semaphore, #tpu.memory_space<semaphore_mem>>)
    %c1_i32_4 = arith.constant 1 : i32
    %c0_i32_5 = arith.constant 0 : i32
    %c0_i32_6 = arith.constant 0 : i32
    %c0_i32_7 = arith.constant 0 : i32
    %5 = tpu.memref_slice %arg1[%c1_i32_4, %c0_i32_6, %c0_i32_7] : memref<3x16x128xf32, #tpu.memory_space<any>> -> memref<1x16x128xf32, #tpu.memory_space<any>>
    %6 = tpu.memref_squeeze %5 : memref<1x16x128xf32, #tpu.memory_space<any>> -> memref<16x128xf32, #tpu.memory_space<any>>
    %c0_i32_8 = arith.constant 0 : i32
    %c0_i32_9 = arith.constant 0 : i32
    %7 = tpu.memref_slice %arg2[%c0_i32_8, %c0_i32_9] : memref<16x128xf32, #tpu.memory_space<any>> -> memref<16x128xf32, #tpu.memory_space<any>>
    %8 = tpu.memref_slice %arg3[%c0_i32_5] : memref<1x!tpu.dma_semaphore, #tpu.memory_space<semaphore_mem>> -> memref<1x!tpu.dma_semaphore, #tpu.memory_space<semaphore_mem>>
    %9 = tpu.memref_squeeze %8 : memref<1x!tpu.dma_semaphore, #tpu.memory_space<semaphore_mem>> -> memref<!tpu.dma_semaphore, #tpu.memory_space<semaphore_mem>>
    tpu.wait_dma2 semaphore(%9 : memref<!tpu.dma_semaphore, #tpu.memory_space<semaphore_mem>>) src(%6 : memref<16x128xf32, #tpu.memory_space<any>>) dst(%7 : memref<16x128xf32, #tpu.memory_space<any>>)
    return
  }
}

</mosaic_0001>

<llo_original>
// kernel: tpu_custom_call.1
$region0: #{tpu_custom_call.1}
  #allocation0 [shape = 'u32[]', space=smem, size = 0x4, offset = 0x4, fixed_abs, tag = 'smem constant byte address 0x4 - core index']
  #allocation1 [shape = 'u32[72,128]{1,0:T(1,128)}', space=vmem, size = 0x9000, scoped, tag = 'internal scratch']
  #allocation2 [shape = 's32[1]{0}', space=sflag, size = 0x4, scoped, tag = 'scratch operand']
  #allocation3 [shape = 's32[]', space=sflag, size = 0x4, offset = 0, fixed_abs, tag = 'sflag constant byte address 0x0 - dummy sync flag']
  #allocation4 [shape = 'u32[0]{0}', space=smem, size = 0, offset = 0, fixed_abs, tag = 'smem constant byte address 0x0 - null']
  %s0 = inlined_call_operand.hbm [shape: f32[3,16,128], index: 0, kind: input, shape index: {}]
  %s1 = inlined_call_operand.hbm [shape: f32[16,128], index: 1, kind: output, shape index: {}]
  %s2 = sld [smem:[#allocation0]]
  $region2: #{tpu_custom_call.1} parent=0
    _
  %s4 = ssub.s32 1, %s2
  %s5 = scalar_select 0, %s4, %s2
  %s6 = scalar_lea.hbm %s0, 16
  %s8 = sshll.u32 1, 14
  %s9 = sxor.u32 4294967295, %s8
  %s11 = sshll.u32 %s6, 4
  %s12 = int_to_ptr.hbm [resolvable:$true] %s11
  %s13 = sshll.u32 %s1, 4
  %s14 = int_to_ptr.hbm [resolvable:$true] %s13
  %17 = dma.general %s12, 256, %s14, [#allocation2], [#allocation3], [#allocation4], 0, 0
  %s18 = smul.u32 16, 1
  %s19 = sshll.u32 %s18, 4
  %20 = dma.done [#allocation2], %s19
  %21 = vsyncmov [#allocation2]
  %s22 = vpop.sfrf %21
  %p23 = scmp.eq.s32.totalorder %s22, 0
  %p24 = pneg %p23
  %26 = shalt.err (%p24)

</llo_original>
